<compile_context>
chip_gen: v6e
topology: v6e:2x2x1
jax: 0.10.0
libtpu: 0.0.40
codegen_flags: <defaults>
</compile_context>

<pallas_src>
import functools

import jax
import jax.numpy as jnp
from jax.experimental import pallas as pl
from jax.experimental.pallas import tpu as pltpu

H1 = 128      # first deep hidden width
H2 = 64       # second deep hidden width
H2_PAD = 128  # zero-padded so h2 is lane/sublane dense


def _round_up(n, m):
    return (n + m - 1) // m * m


def wide_deep_kernel(x_ref, w1t_ref, b1_ref, w2t_ref, b2_ref, w3t_ref,
                     ww_ref, bsum_ref, o_ref):
    """One batch tile, batch on the lane axis.

    x_ref   : (D, TB)       compute dtype (f32 or bf16)
    w1t_ref : (H1, D)       compute dtype
    b1_ref  : (H1, 1)       f32
    w2t_ref : (H2_PAD, H1)  compute dtype  (rows >= H2 are zero)
    b2_ref  : (H2_PAD, 1)   f32            (rows >= H2 are zero)
    w3t_ref : (1, H2_PAD)   compute dtype  (cols >= H2 are zero)
    ww_ref  : (D, 1)        f32
    bsum_ref: (1, 1)        f32            (= bw + b3)
    o_ref   : (1, TB)       f32
    """
    x = x_ref[...]

    # Deep path on the MXU: h1 = relu(W1^T x + b1), h2 = relu(W2p^T h1 + b2p)
    h1 = jnp.dot(w1t_ref[...], x, preferred_element_type=jnp.float32) + b1_ref[...]
    h1 = jnp.maximum(h1, 0.0)
    h2 = jnp.dot(w2t_ref[...], h1.astype(w2t_ref.dtype),
                 preferred_element_type=jnp.float32) + b2_ref[...]
    h2 = jnp.maximum(h2, 0.0)
    deep = jnp.dot(w3t_ref[...], h2.astype(w3t_ref.dtype),
                   preferred_element_type=jnp.float32)            # (1, TB)

    # Wide path kept off the MXU (degenerate N=1): VPU multiply + sublane reduce.
    wide = jnp.sum(x.astype(jnp.float32) * ww_ref[...], axis=0, keepdims=True)

    o_ref[...] = (deep + wide + bsum_ref[...]).astype(o_ref.dtype)


def prepare_kernel_params(params, compute_dtype=jnp.float32):
    """One-time layout plumbing: transpose, zero-pad width-64 layer, fold biases."""
    ww, bw, w1, b1, w2, b2, w3, b3 = params
    D = w1.shape[0]

    w1t = w1.T.astype(compute_dtype)                                  # (H1, D)
    b1c = b1.reshape(H1, 1).astype(jnp.float32)                       # (H1, 1)
    w2t = jnp.concatenate(
        [w2.T, jnp.zeros((H2_PAD - H2, H1), w2.dtype)], axis=0
    ).astype(compute_dtype)                                           # (H2_PAD, H1)
    b2c = jnp.concatenate(
        [b2.reshape(H2, 1), jnp.zeros((H2_PAD - H2, 1), b2.dtype)], axis=0
    ).astype(jnp.float32)                                             # (H2_PAD, 1)
    w3t = jnp.concatenate(
        [w3.T, jnp.zeros((1, H2_PAD - H2), w3.dtype)], axis=1
    ).astype(compute_dtype)                                           # (1, H2_PAD)
    wwc = ww.reshape(D, 1).astype(jnp.float32)                        # (D, 1)
    bsum = (bw + b3).reshape(1, 1).astype(jnp.float32)                # (1, 1)
    return (w1t, b1c, w2t, b2c, w3t, wwc, bsum)


@functools.partial(jax.jit, static_argnames=("block_b", "compute_dtype"))
def wide_deep_forward(x, kernel_params, *, block_b=4096, compute_dtype=jnp.float32):
    """x: (B, D) float32. Returns (B,) float32, matching (wide+deep).view(-1)."""
    B, D = x.shape
    w1t, b1c, w2t, b2c, w3t, wwc, bsum = kernel_params

    # Tile of batch rows on the lane axis; keep it a multiple of 128 and pad B.
    tb = min(_round_up(block_b, 128), _round_up(B, 128))
    b_pad = _round_up(B, tb)
    grid = (b_pad // tb,)

    # Batch-on-lanes layout: x^T is (D, B_pad).
    xt = jnp.transpose(x).astype(compute_dtype)
    if b_pad != B:
        xt = jnp.pad(xt, ((0, 0), (0, b_pad - B)))

    bytes_x = b_pad * D * jnp.dtype(compute_dtype).itemsize
    bytes_w = sum(int(a.size) * a.dtype.itemsize for a in kernel_params)
    cost = pl.CostEstimate(
        flops=2 * b_pad * (D * H1 + H1 * H2 + H2 + D),
        transcendentals=0,
        bytes_accessed=bytes_x + bytes_w + 4 * b_pad,
    )

    const = lambda i: (0, 0)
    out = pl.pallas_call(
        wide_deep_kernel,
        out_shape=jax.ShapeDtypeStruct((1, b_pad), jnp.float32),
        grid=grid,
        in_specs=[
            pl.BlockSpec((D, tb), lambda i: (0, i)),   # x tile (batch on lanes)
            pl.BlockSpec((H1, D), const),              # W1^T   (resident)
            pl.BlockSpec((H1, 1), const),              # b1
            pl.BlockSpec((H2_PAD, H1), const),         # W2^T   zero-padded
            pl.BlockSpec((H2_PAD, 1), const),          # b2     zero-padded
            pl.BlockSpec((1, H2_PAD), const),          # W3^T   zero-padded
            pl.BlockSpec((D, 1), const),               # wide weights
            pl.BlockSpec((1, 1), const),               # bw + b3
        ],
        out_specs=pl.BlockSpec((1, tb), lambda i: (0, i)),
        compiler_params=pltpu.CompilerParams(
            dimension_semantics=("parallel",),         # megacore-shard the batch axis
        ),
        cost_estimate=cost,
    )(xt, w1t, b1c, w2t, b2c, w3t, wwc, bsum)

    return out[0, :B]


def init_params(key, input_dim):
    """Deterministic synthetic parameters with the shapes implied by __init__."""
    keys = jax.random.split(key, 8)

    def lin(kw, kb, fan_in, fan_out):
        # stored as (in, out) so the math reads y = x @ W + b
        w = jax.random.normal(kw, (fan_in, fan_out), jnp.float32) * (1.0 / jnp.sqrt(fan_in))
        b = jax.random.normal(kb, (1, fan_out), jnp.float32) * 0.01
        return w, b

    ww, bw = lin(keys[0], keys[1], input_dim, 1)     # wide_layer
    w1, b1 = lin(keys[2], keys[3], input_dim, H1)    # deep_layers[0]
    w2, b2 = lin(keys[4], keys[5], H1, H2)           # deep_layers[2]
    w3, b3 = lin(keys[6], keys[7], H2, 1)            # deep_layers[4]
    return (ww, bw, w1, b1, w2, b2, w3, b3)


def reference_forward(x, params):
    """Pure-JAX reference of the PyTorch forward for correctness check."""
    ww, bw, w1, b1, w2, b2, w3, b3 = params
    wide = x @ ww + bw
    h1 = jnp.maximum(x @ w1 + b1, 0.0)
    h2 = jnp.maximum(h1 @ w2 + b2, 0.0)
    deep = h2 @ w3 + b3
    return (wide + deep).reshape(-1)


if __name__ == "__main__":
    key = jax.random.PRNGKey(0)
    k_x, k_p = jax.random.split(key)

    B, D = 8, 16  # small batch / input_dim
    x = jax.random.normal(k_x, (B, D), jnp.float32)
    params = init_params(k_p, D)
    ref = reference_forward(x, params)

    # f32 compute: must match the pure-JAX reference tightly.
    kp32 = prepare_kernel_params(params, jnp.float32)
    out = wide_deep_forward(x, kp32, block_b=512, compute_dtype=jnp.float32)
    out = jax.block_until_ready(out)
    assert out.shape == (B,)
    assert jnp.allclose(out, ref, atol=1e-5, rtol=1e-5), (out, ref)

    # bf16 MXU feeds (v6e/v7x fast path), f32 accumulation: looser tolerance.
    kp16 = prepare_kernel_params(params, jnp.bfloat16)
    out16 = wide_deep_forward(x, kp16, block_b=512, compute_dtype=jnp.bfloat16)
    out16 = jax.block_until_ready(out16)
    assert jnp.allclose(out16, ref, atol=5e-2, rtol=5e-2), (out16, ref)

    print("KERNEL_OK")
</pallas_src>

<mosaic_0001>
module attributes {stable_mosaic.version = 11 : i64} {
  func.func @wide_deep_kernel(%arg0: i32, %arg1: memref<16x128xf32, #tpu.memory_space<vmem>>, %arg2: memref<128x16xf32, #tpu.memory_space<vmem>>, %arg3: memref<128x1xf32, #tpu.memory_space<vmem>>, %arg4: memref<128x128xf32, #tpu.memory_space<vmem>>, %arg5: memref<128x1xf32, #tpu.memory_space<vmem>>, %arg6: memref<1x128xf32, #tpu.memory_space<vmem>>, %arg7: memref<16x1xf32, #tpu.memory_space<vmem>>, %arg8: memref<1x1xf32, #tpu.memory_space<vmem>>, %arg9: memref<1x128xf32, #tpu.memory_space<vmem>>) attributes {dimension_semantics = [#tpu.dimension_semantics<parallel>], iteration_bounds = array<i64: 1>, scalar_prefetch = 0 : i64, scratch_operands = 0 : i64, tpu.core_type = #tpu.core_type<tc>, window_params = [{transform_indices = @transform_0, window_bounds = array<i64: 16, 128>}, {pipeline_mode = #tpu.pipeline_mode<synchronous>, transform_indices = @transform_1, window_bounds = array<i64: 128, 16>}, {pipeline_mode = #tpu.pipeline_mode<synchronous>, transform_indices = @transform_2, window_bounds = array<i64: 128, 1>}, {pipeline_mode = #tpu.pipeline_mode<synchronous>, transform_indices = @transform_3, window_bounds = array<i64: 128, 128>}, {pipeline_mode = #tpu.pipeline_mode<synchronous>, transform_indices = @transform_4, window_bounds = array<i64: 128, 1>}, {pipeline_mode = #tpu.pipeline_mode<synchronous>, transform_indices = @transform_5, window_bounds = array<i64: 1, 128>}, {pipeline_mode = #tpu.pipeline_mode<synchronous>, transform_indices = @transform_6, window_bounds = array<i64: 16, 1>}, {pipeline_mode = #tpu.pipeline_mode<synchronous>, transform_indices = @transform_7, window_bounds = array<i64: 1, 1>}, {transform_indices = @transform_8, window_bounds = array<i64: 1, 128>}]} {
    %c0 = arith.constant 0 : index
    %c0_0 = arith.constant 0 : index
    %0 = vector.load %arg1[%c0, %c0_0] : memref<16x128xf32, #tpu.memory_space<vmem>>, vector<16x128xf32>
    %c0_1 = arith.constant 0 : index
    %c0_2 = arith.constant 0 : index
    %1 = vector.load %arg2[%c0_1, %c0_2] : memref<128x16xf32, #tpu.memory_space<vmem>>, vector<128x16xf32>
    %cst = arith.constant dense<0.000000e+00> : vector<128x128xf32>
    %2 = tpu.matmul %1, %0, %cst {dimension_numbers = #tpu.dot_dimension_numbers<[1], [0], [0], [1], [0, 0, 1, 1], [], []>} : vector<128x16xf32>, vector<16x128xf32>, vector<128x128xf32> -> vector<128x128xf32>
    %c0_3 = arith.constant 0 : index
    %c0_4 = arith.constant 0 : index
    %3 = vector.load %arg3[%c0_3, %c0_4] : memref<128x1xf32, #tpu.memory_space<vmem>>, vector<128x1xf32>
    %4 = vector.broadcast %3 : vector<128x1xf32> to vector<128x128xf32>
    %5 = arith.addf %2, %4 : vector<128x128xf32>
    %cst_5 = arith.constant 0.000000e+00 : f32
    %6 = vector.broadcast %cst_5 : f32 to vector<128x128xf32>
    %7 = arith.maximumf %5, %6 : vector<128x128xf32>
    %c0_6 = arith.constant 0 : index
    %c0_7 = arith.constant 0 : index
    %8 = vector.load %arg4[%c0_6, %c0_7] : memref<128x128xf32, #tpu.memory_space<vmem>>, vector<128x128xf32>
    %cst_8 = arith.constant dense<0.000000e+00> : vector<128x128xf32>
    %9 = tpu.matmul %8, %7, %cst_8 {dimension_numbers = #tpu.dot_dimension_numbers<[1], [0], [0], [1], [0, 0, 1, 1], [], []>} : vector<128x128xf32>, vector<128x128xf32>, vector<128x128xf32> -> vector<128x128xf32>
    %c0_9 = arith.constant 0 : index
    %c0_10 = arith.constant 0 : index
    %10 = vector.load %arg5[%c0_9, %c0_10] : memref<128x1xf32, #tpu.memory_space<vmem>>, vector<128x1xf32>
    %11 = vector.broadcast %10 : vector<128x1xf32> to vector<128x128xf32>
    %12 = arith.addf %9, %11 : vector<128x128xf32>
    %cst_11 = arith.constant 0.000000e+00 : f32
    %13 = vector.broadcast %cst_11 : f32 to vector<128x128xf32>
    %14 = arith.maximumf %12, %13 : vector<128x128xf32>
    %c0_12 = arith.constant 0 : index
    %c0_13 = arith.constant 0 : index
    %15 = vector.load %arg6[%c0_12, %c0_13] : memref<1x128xf32, #tpu.memory_space<vmem>>, vector<1x128xf32>
    %cst_14 = arith.constant dense<0.000000e+00> : vector<1x128xf32>
    %16 = tpu.matmul %15, %14, %cst_14 {dimension_numbers = #tpu.dot_dimension_numbers<[1], [0], [0], [1], [0, 0, 1, 1], [], []>} : vector<1x128xf32>, vector<128x128xf32>, vector<1x128xf32> -> vector<1x128xf32>
    %c0_15 = arith.constant 0 : index
    %c0_16 = arith.constant 0 : index
    %17 = vector.load %arg7[%c0_15, %c0_16] : memref<16x1xf32, #tpu.memory_space<vmem>>, vector<16x1xf32>
    %18 = vector.broadcast %17 : vector<16x1xf32> to vector<16x128xf32>
    %19 = arith.mulf %0, %18 : vector<16x128xf32>
    %cst_17 = arith.constant dense<0.000000e+00> : vector<128xf32>
    %20 = vector.multi_reduction <add>, %19, %cst_17 [0] : vector<16x128xf32> to vector<128xf32>
    %21 = vector.shape_cast %20 : vector<128xf32> to vector<1x128xf32>
    %22 = arith.addf %16, %21 : vector<1x128xf32>
    %c0_18 = arith.constant 0 : index
    %c0_19 = arith.constant 0 : index
    %23 = vector.load %arg8[%c0_18, %c0_19] : memref<1x1xf32, #tpu.memory_space<vmem>>, vector<1x1xf32>
    %24 = vector.broadcast %23 : vector<1x1xf32> to vector<1x128xf32>
    %25 = arith.addf %22, %24 : vector<1x128xf32>
    %c0_20 = arith.constant 0 : index
    %c0_21 = arith.constant 0 : index
    %26 = vector.load %arg9[%c0_20, %c0_21] : memref<1x128xf32, #tpu.memory_space<vmem>>, vector<1x128xf32>
    tpu.vector_store %arg9[%c0_20, %c0_21], %25 {strides = array<i32>} : memref<1x128xf32, #tpu.memory_space<vmem>>, vector<1x128xf32>,
    return
  }
  func.func @transform_0(%arg0: i32) -> (i32, i32) {
    %c0_i32 = arith.constant 0 : i32
    %c0_i32_0 = arith.constant 0 : i32
    return %c0_i32, %arg0 : i32, i32
  }
  func.func @transform_1(%arg0: i32) -> (i32, i32) {
    %c0_i32 = arith.constant 0 : i32
    %c0_i32_0 = arith.constant 0 : i32
    %c0_i32_1 = arith.constant 0 : i32
    return %c0_i32, %c0_i32_0 : i32, i32
  }
  func.func @transform_2(%arg0: i32) -> (i32, i32) {
    %c0_i32 = arith.constant 0 : i32
    %c0_i32_0 = arith.constant 0 : i32
    %c0_i32_1 = arith.constant 0 : i32
    return %c0_i32, %c0_i32_0 : i32, i32
  }
  func.func @transform_3(%arg0: i32) -> (i32, i32) {
    %c0_i32 = arith.constant 0 : i32
    %c0_i32_0 = arith.constant 0 : i32
    %c0_i32_1 = arith.constant 0 : i32
    return %c0_i32, %c0_i32_0 : i32, i32
  }
  func.func @transform_4(%arg0: i32) -> (i32, i32) {
    %c0_i32 = arith.constant 0 : i32
    %c0_i32_0 = arith.constant 0 : i32
    %c0_i32_1 = arith.constant 0 : i32
    return %c0_i32, %c0_i32_0 : i32, i32
  }
  func.func @transform_5(%arg0: i32) -> (i32, i32) {
    %c0_i32 = arith.constant 0 : i32
    %c0_i32_0 = arith.constant 0 : i32
    %c0_i32_1 = arith.constant 0 : i32
    return %c0_i32, %c0_i32_0 : i32, i32
  }
  func.func @transform_6(%arg0: i32) -> (i32, i32) {
    %c0_i32 = arith.constant 0 : i32
    %c0_i32_0 = arith.constant 0 : i32
    %c0_i32_1 = arith.constant 0 : i32
    return %c0_i32, %c0_i32_0 : i32, i32
  }
  func.func @transform_7(%arg0: i32) -> (i32, i32) {
    %c0_i32 = arith.constant 0 : i32
    %c0_i32_0 = arith.constant 0 : i32
    %c0_i32_1 = arith.constant 0 : i32
    return %c0_i32, %c0_i32_0 : i32, i32
  }
  func.func @transform_8(%arg0: i32) -> (i32, i32) {
    %c0_i32 = arith.constant 0 : i32
    %c0_i32_0 = arith.constant 0 : i32
    return %c0_i32, %arg0 : i32, i32
  }
}

</mosaic_0001>

<llo_original>
// kernel: wide_deep_forward.1
$region0: #{wide_deep_forward.1}
  #allocation0 [shape = 'u32[]', space=smem, size = 0x4, offset = 0x4, fixed_abs, tag = 'smem constant byte address 0x4 - core index']
  #allocation1 [shape = 'u32[144,128]{1,0:T(1,128)}', space=vmem, size = 0x12000, scoped, tag = 'internal scratch']
  #allocation2 [shape = 'f32[1,1]{1,0:T(1,128)S(1)}', space=vmem, size = 0x200, scoped, tag = 'scoped memory for wide_deep_forward.1']
  %s0 = inlined_call_operand.vmem [shape: f32[16,128], index: 0, kind: input, shape index: {}]
  %s1 = inlined_call_operand.vmem [shape: f32[128,16], index: 1, kind: input, shape index: {}]
  %s2 = inlined_call_operand.vmem [shape: f32[128,1], index: 2, kind: input, shape index: {}]
  %s3 = inlined_call_operand.vmem [shape: f32[128,128], index: 3, kind: input, shape index: {}]
  %s4 = inlined_call_operand.vmem [shape: f32[128,1], index: 4, kind: input, shape index: {}]
  %s5 = inlined_call_operand.vmem [shape: f32[1,128], index: 5, kind: input, shape index: {}]
  %s6 = inlined_call_operand.vmem [shape: f32[16,1], index: 6, kind: input, shape index: {}]
  %s7 = inlined_call_operand.<no memory space> [shape: f32[1,1], index: 7, kind: input, shape index: {}]
  %s8 = inlined_call_operand.vmem [shape: f32[1,128], index: 8, kind: output, shape index: {}]
  %s9 = sld [smem:[#allocation0]]
  $region42: #{wide_deep_forward.1} parent=0
    _
  %s11 = ssub.s32 1, %s9
  %s12 = scalar_select 0, %s11, %s9
  %v13 = vstv %s7
  %14 = vst [vmem:[#allocation2] sm:$0x1] %v13
  // Predicated region
  $region2: #{wide_deep_forward.1} parent=0 // pred_check
    _
  $region3: #{wide_deep_forward.1} parent=0 // pred_check_branch
    %16 = sbr.rel (0) target = $region5
  $region4: #{wide_deep_forward.1} parent=0 // pred_region
    _
  $region5: #{wide_deep_forward.1} parent=0 // pred_fallthru
    _
  // Predicated region
  $region6: #{wide_deep_forward.1} parent=0 // pred_check
    _
  $region7: #{wide_deep_forward.1} parent=0 // pred_check_branch
    %18 = sbr.rel (0) target = $region9
  $region8: #{wide_deep_forward.1} parent=0 // pred_region
    _
  $region9: #{wide_deep_forward.1} parent=0 // pred_fallthru
    _
  // Predicated region
  $region10: #{wide_deep_forward.1} parent=0 // pred_check
    _
  $region11: #{wide_deep_forward.1} parent=0 // pred_check_branch
    %20 = sbr.rel (0) target = $region13
  $region12: #{wide_deep_forward.1} parent=0 // pred_region
    _
  $region13: #{wide_deep_forward.1} parent=0 // pred_fallthru
    _
  // Predicated region
  $region14: #{wide_deep_forward.1} parent=0 // pred_check
    _
  $region15: #{wide_deep_forward.1} parent=0 // pred_check_branch
    %22 = sbr.rel (0) target = $region17
  $region16: #{wide_deep_forward.1} parent=0 // pred_region
    _
  $region17: #{wide_deep_forward.1} parent=0 // pred_fallthru
    _
  // Predicated region
  $region18: #{wide_deep_forward.1} parent=0 // pred_check
    _
  $region19: #{wide_deep_forward.1} parent=0 // pred_check_branch
    %24 = sbr.rel (0) target = $region21
  $region20: #{wide_deep_forward.1} parent=0 // pred_region
    _
  $region21: #{wide_deep_forward.1} parent=0 // pred_fallthru
    _
  // Predicated region
  $region22: #{wide_deep_forward.1} parent=0 // pred_check
    _
  $region23: #{wide_deep_forward.1} parent=0 // pred_check_branch
    %26 = sbr.rel (0) target = $region25
  $region24: #{wide_deep_forward.1} parent=0 // pred_region
    _
  $region25: #{wide_deep_forward.1} parent=0 // pred_fallthru
    _
  // Predicated region
  $region26: #{wide_deep_forward.1} parent=0 // pred_check
    _
  $region27: #{wide_deep_forward.1} parent=0 // pred_check_branch
    %28 = sbr.rel (0) target = $region29
  $region28: #{wide_deep_forward.1} parent=0 // pred_region
    _
  $region29: #{wide_deep_forward.1} parent=0 // pred_fallthru
    _
  // Predicated region
  $region30: #{wide_deep_forward.1} parent=0 // pred_check
    _
  $region31: #{wide_deep_forward.1} parent=0 // pred_check_branch
    %30 = sbr.rel (0) target = $region33
  $region32: #{wide_deep_forward.1} parent=0 // pred_region
    _
  $region33: #{wide_deep_forward.1} parent=0 // pred_fallthru
    _
  %v31 = vld [vmem:[%s0] sm:$0xff]
  %v32 = vld [vmem:[%s0 + $0x8] sm:$0xff]
  %v33 = vld [vmem:[%s1] sm:$0xff]
  %v34 = vld [vmem:[%s1 + $0x8] sm:$0xff]
  %v35 = vld [vmem:[%s1 + $0x10] sm:$0xff]
  %v36 = vld [vmem:[%s1 + $0x18] sm:$0xff]
  %v37 = vld [vmem:[%s1 + $0x20] sm:$0xff]
  %v38 = vld [vmem:[%s1 + $0x28] sm:$0xff]
  %v39 = vld [vmem:[%s1 + $0x30] sm:$0xff]
  %v40 = vld [vmem:[%s1 + $0x38] sm:$0xff]
  %v41 = vld [vmem:[%s1 + $0x40] sm:$0xff]
  %v42 = vld [vmem:[%s1 + $0x48] sm:$0xff]
  %v43 = vld [vmem:[%s1 + $0x50] sm:$0xff]
  %v44 = vld [vmem:[%s1 + $0x58] sm:$0xff]
  %v45 = vld [vmem:[%s1 + $0x60] sm:$0xff]
  %v46 = vld [vmem:[%s1 + $0x68] sm:$0xff]
  %v47 = vld [vmem:[%s1 + $0x70] sm:$0xff]
  %v48 = vld [vmem:[%s1 + $0x78] sm:$0xff]
  %v49 = vld [vmem:[%s2] sm:$0xff]
  %v50 = vld [vmem:[%s2 + $0x8] sm:$0xff]
  %v51 = vld [vmem:[%s2 + $0x10] sm:$0xff]
  %v52 = vld [vmem:[%s2 + $0x18] sm:$0xff]
  %v53 = vld [vmem:[%s2 + $0x20] sm:$0xff]
  %v54 = vld [vmem:[%s2 + $0x28] sm:$0xff]
  %v55 = vld [vmem:[%s2 + $0x30] sm:$0xff]
  %v56 = vld [vmem:[%s2 + $0x38] sm:$0xff]
  %v57 = vld [vmem:[%s2 + $0x40] sm:$0xff]
  %v58 = vld [vmem:[%s2 + $0x48] sm:$0xff]
  %v59 = vld [vmem:[%s2 + $0x50] sm:$0xff]
  %v60 = vld [vmem:[%s2 + $0x58] sm:$0xff]
  %v61 = vld [vmem:[%s2 + $0x60] sm:$0xff]
  %v62 = vld [vmem:[%s2 + $0x68] sm:$0xff]
  %v63 = vld [vmem:[%s2 + $0x70] sm:$0xff]
  %v64 = vld [vmem:[%s2 + $0x78] sm:$0xff]
  %66 = vset.pattern.permute.xlu0 0
  %67 = vperm.xlu0 %66, %v49
  %v68 = vpop.permute.xlu0 %67
  %71 = vset.pattern.permute.xlu0 0
  %72 = vperm.xlu0 %71, %v50
  %v73 = vpop.permute.xlu0 %72
  %76 = vset.pattern.permute.xlu0 0
  %77 = vperm.xlu0 %76, %v51
  %v78 = vpop.permute.xlu0 %77
  %81 = vset.pattern.permute.xlu0 0
  %82 = vperm.xlu0 %81, %v52
  %v83 = vpop.permute.xlu0 %82
  %86 = vset.pattern.permute.xlu0 0
  %87 = vperm.xlu0 %86, %v53
  %v88 = vpop.permute.xlu0 %87
  %91 = vset.pattern.permute.xlu0 0
  %92 = vperm.xlu0 %91, %v54
  %v93 = vpop.permute.xlu0 %92
  %96 = vset.pattern.permute.xlu0 0
  %97 = vperm.xlu0 %96, %v55
  %v98 = vpop.permute.xlu0 %97
  %101 = vset.pattern.permute.xlu0 0
  %102 = vperm.xlu0 %101, %v56
  %v103 = vpop.permute.xlu0 %102
  %106 = vset.pattern.permute.xlu0 0
  %107 = vperm.xlu0 %106, %v57
  %v108 = vpop.permute.xlu0 %107
  %111 = vset.pattern.permute.xlu0 0
  %112 = vperm.xlu0 %111, %v58
  %v113 = vpop.permute.xlu0 %112
  %116 = vset.pattern.permute.xlu0 0
  %117 = vperm.xlu0 %116, %v59
  %v118 = vpop.permute.xlu0 %117
  %121 = vset.pattern.permute.xlu0 0
  %122 = vperm.xlu0 %121, %v60
  %v123 = vpop.permute.xlu0 %122
  %126 = vset.pattern.permute.xlu0 0
  %127 = vperm.xlu0 %126, %v61
  %v128 = vpop.permute.xlu0 %127
  %131 = vset.pattern.permute.xlu0 0
  %132 = vperm.xlu0 %131, %v62
  %v133 = vpop.permute.xlu0 %132
  %136 = vset.pattern.permute.xlu0 0
  %137 = vperm.xlu0 %136, %v63
  %v138 = vpop.permute.xlu0 %137
  %141 = vset.pattern.permute.xlu0 0
  %142 = vperm.xlu0 %141, %v64
  %v143 = vpop.permute.xlu0 %142
  %vm145 = vcmask 130048
  %v147 = vsel %vm145, %v33, 0
  %v150 = vsel %vm145, %v34, 0
  %v153 = vsel %vm145, %v35, 0
  %v156 = vsel %vm145, %v36, 0
  %v159 = vsel %vm145, %v37, 0
  %v162 = vsel %vm145, %v38, 0
  %v165 = vsel %vm145, %v39, 0
  %v168 = vsel %vm145, %v40, 0
  %v171 = vsel %vm145, %v41, 0
  %v174 = vsel %vm145, %v42, 0
  %v177 = vsel %vm145, %v43, 0
  %v180 = vsel %vm145, %v44, 0
  %v183 = vsel %vm145, %v45, 0
  %v186 = vsel %vm145, %v46, 0
  %v189 = vsel %vm145, %v47, 0
  %v192 = vsel %vm145, %v48, 0
  %194 = vmatprep.subr.mxu0 0.0
  %195 = vmatpush1.msra.mxu0 0.0
  %196 = vmatprep.subr.mxu0 0.0
  %197 = vmatpush1.msra.mxu0 0.0
  %198 = vmatprep.subr.mxu0 0.0
  %199 = vmatpush1.msra.mxu0 0.0
  %200 = vmatprep.subr.mxu0 0.0
  %201 = vmatpush1.msra.mxu0 0.0
  %202 = vmatprep.subr.mxu0 0.0
  %203 = vmatpush1.msra.mxu0 0.0
  %204 = vmatprep.subr.mxu0 0.0
  %205 = vmatpush1.msra.mxu0 0.0
  %206 = vmatprep.subr.mxu0 0.0
  %207 = vmatpush1.msra.mxu0 0.0
  %208 = vmatprep.subr.mxu0 0.0
  %209 = vmatpush1.msra.mxu0 0.0
  %210 = vmatprep.subr.mxu0 0.0
  %211 = vmatpush1.msra.mxu0 0.0
  %212 = vmatprep.subr.mxu0 0.0
  %213 = vmatpush1.msra.mxu0 0.0
  %214 = vmatprep.subr.mxu0 0.0
  %215 = vmatpush1.msra.mxu0 0.0
  %216 = vmatprep.subr.mxu0 0.0
  %217 = vmatpush1.msra.mxu0 0.0
  %218 = vmatprep.subr.mxu0 0.0
  %219 = vmatpush1.msra.mxu0 0.0
  %220 = vmatprep.subr.mxu0 0.0
  %221 = vmatpush1.msra.mxu0 0.0
  %222 = vmatprep.subr.mxu0 0.0
  %223 = vmatpush1.msra.mxu0 %v32
  %224 = vmatprep.subr.mxu0 0.0
  %225 = vmatpush1.msra.mxu0 %v31
  %226 = vmatprep.subr.mxu0 0.0
  %227 = vmatpush2.msra.mxu0 0.0
  %228 = vmatprep.subr.mxu0 0.0
  %229 = vmatpush2.msra.mxu0 0.0
  %230 = vmatprep.subr.mxu0 0.0
  %231 = vmatpush2.msra.mxu0 0.0
  %232 = vmatprep.subr.mxu0 0.0
  %233 = vmatpush2.msra.mxu0 0.0
  %234 = vmatprep.subr.mxu0 0.0
  %235 = vmatpush2.msra.mxu0 0.0
  %236 = vmatprep.subr.mxu0 0.0
  %237 = vmatpush2.msra.mxu0 0.0
  %238 = vmatprep.subr.mxu0 0.0
  %239 = vmatpush2.msra.mxu0 0.0
  %240 = vmatprep.subr.mxu0 0.0
  %241 = vmatpush2.msra.mxu0 0.0
  %242 = vmatprep.subr.mxu0 0.0
  %243 = vmatpush2.msra.mxu0 0.0
  %244 = vmatprep.subr.mxu0 0.0
  %245 = vmatpush2.msra.mxu0 0.0
  %246 = vmatprep.subr.mxu0 0.0
  %247 = vmatpush2.msra.mxu0 0.0
  %248 = vmatprep.subr.mxu0 0.0
  %249 = vmatpush2.msra.mxu0 0.0
  %250 = vmatprep.subr.mxu0 0.0
  %251 = vmatpush2.msra.mxu0 0.0
  %252 = vmatprep.subr.mxu0 0.0
  %253 = vmatpush2.msra.mxu0 0.0
  %254 = vmatprep.subr.mxu0 0.0
  %255 = vmatpush2.msra.mxu0 0.0
  %256 = vmatprep.subr.mxu0 0.0
  %257 = vmatpush2.msra.mxu0 0.0
  %258 = vmatprep.mubr.f32.mxu0 0.0
  %259 = vmatmul.mubr.f32.gmra.mxu0 %v147
  %v260 = vpop.f32.mrf.mxu0
  %v261 = vadd.f32 %v68, %v260
  %v262 = vpop.f32.mrf.mxu0
  %263 = vmatprep.mubr.f32.mxu0 0.0
  %264 = vmatmul.mubr.f32.gmra.mxu0 %v150
  %v265 = vpop.f32.mrf.mxu0
  %v266 = vadd.f32 %v73, %v265
  %v267 = vpop.f32.mrf.mxu0
  %268 = vmatprep.mubr.f32.mxu0 0.0
  %269 = vmatmul.mubr.f32.gmra.mxu0 %v153
  %v270 = vpop.f32.mrf.mxu0
  %v271 = vadd.f32 %v78, %v270
  %v272 = vpop.f32.mrf.mxu0
  %273 = vmatprep.mubr.f32.mxu0 0.0
  %274 = vmatmul.mubr.f32.gmra.mxu0 %v156
  %v275 = vpop.f32.mrf.mxu0
  %v276 = vadd.f32 %v83, %v275
  %v277 = vpop.f32.mrf.mxu0
  %278 = vmatprep.mubr.f32.mxu0 0.0
  %279 = vmatmul.mubr.f32.gmra.mxu0 %v159
  %v280 = vpop.f32.mrf.mxu0
  %v281 = vadd.f32 %v88, %v280
  %v282 = vpop.f32.mrf.mxu0
  %283 = vmatprep.mubr.f32.mxu0 0.0
  %284 = vmatmul.mubr.f32.gmra.mxu0 %v162
  %v285 = vpop.f32.mrf.mxu0
  %v286 = vadd.f32 %v93, %v285
  %v287 = vpop.f32.mrf.mxu0
  %288 = vmatprep.mubr.f32.mxu0 0.0
  %289 = vmatmul.mubr.f32.gmra.mxu0 %v165
  %v290 = vpop.f32.mrf.mxu0
  %v291 = vadd.f32 %v98, %v290
  %v292 = vpop.f32.mrf.mxu0
  %293 = vmatprep.mubr.f32.mxu0 0.0
  %294 = vmatmul.mubr.f32.gmra.mxu0 %v168
  %v295 = vpop.f32.mrf.mxu0
  %v296 = vadd.f32 %v103, %v295
  %v297 = vpop.f32.mrf.mxu0
  %298 = vmatprep.mubr.f32.mxu0 0.0
  %299 = vmatmul.mubr.f32.gmra.mxu0 %v171
  %v300 = vpop.f32.mrf.mxu0
  %v301 = vadd.f32 %v108, %v300
  %v302 = vpop.f32.mrf.mxu0
  %303 = vmatprep.mubr.f32.mxu0 0.0
  %304 = vmatmul.mubr.f32.gmra.mxu0 %v174
  %v305 = vpop.f32.mrf.mxu0
  %v306 = vadd.f32 %v113, %v305
  %v307 = vpop.f32.mrf.mxu0
  %308 = vmatprep.mubr.f32.mxu0 0.0
  %309 = vmatmul.mubr.f32.gmra.mxu0 %v177
  %v310 = vpop.f32.mrf.mxu0
  %v311 = vadd.f32 %v118, %v310
  %v312 = vpop.f32.mrf.mxu0
  %313 = vmatprep.mubr.f32.mxu0 0.0
  %314 = vmatmul.mubr.f32.gmra.mxu0 %v180
  %v315 = vpop.f32.mrf.mxu0
  %v316 = vadd.f32 %v123, %v315
  %v317 = vpop.f32.mrf.mxu0
  %318 = vmatprep.mubr.f32.mxu0 0.0
  %319 = vmatmul.mubr.f32.gmra.mxu0 %v183
  %v320 = vpop.f32.mrf.mxu0
  %v321 = vadd.f32 %v128, %v320
  %v322 = vpop.f32.mrf.mxu0
  %323 = vmatprep.mubr.f32.mxu0 0.0
  %324 = vmatmul.mubr.f32.gmra.mxu0 %v186
  %v325 = vpop.f32.mrf.mxu0
  %v326 = vadd.f32 %v133, %v325
  %v327 = vpop.f32.mrf.mxu0
  %328 = vmatprep.mubr.f32.mxu0 0.0
  %329 = vmatmul.mubr.f32.gmra.mxu0 %v189
  %v330 = vpop.f32.mrf.mxu0
  %v331 = vadd.f32 %v138, %v330
  %v332 = vpop.f32.mrf.mxu0
  %333 = vmatprep.mubr.f32.mxu0 0.0
  %334 = vmatmul.mubr.f32.gmra.mxu0 %v192
  %v335 = vpop.f32.mrf.mxu0
  %v336 = vadd.f32 %v143, %v335
  %v337 = vpop.f32.mrf.mxu0
  %338 = vdwg.mxu0
  %v339 = vmax.f32 %v261, 0.0
  %v340 = vmax.f32 %v266, 0.0
  %v341 = vmax.f32 %v271, 0.0
  %v342 = vmax.f32 %v276, 0.0
  %v343 = vmax.f32 %v281, 0.0
  %v344 = vmax.f32 %v286, 0.0
  %v345 = vmax.f32 %v291, 0.0
  %v346 = vmax.f32 %v296, 0.0
  %v347 = vmax.f32 %v301, 0.0
  %v348 = vmax.f32 %v306, 0.0
  %v349 = vmax.f32 %v311, 0.0
  %v350 = vmax.f32 %v316, 0.0
  %v351 = vmax.f32 %v321, 0.0
  %v352 = vmax.f32 %v326, 0.0
  %v353 = vmax.f32 %v331, 0.0
  %v354 = vmax.f32 %v336, 0.0
  %v355 = vld [vmem:[%s3] sm:$0xff]
  %v356 = vld [vmem:[%s3 + $0x8] sm:$0xff]
  %v357 = vld [vmem:[%s3 + $0x10] sm:$0xff]
  %v358 = vld [vmem:[%s3 + $0x18] sm:$0xff]
  %v359 = vld [vmem:[%s3 + $0x20] sm:$0xff]
  %v360 = vld [vmem:[%s3 + $0x28] sm:$0xff]
  %v361 = vld [vmem:[%s3 + $0x30] sm:$0xff]
  %v362 = vld [vmem:[%s3 + $0x38] sm:$0xff]
  %v363 = vld [vmem:[%s3 + $0x40] sm:$0xff]
  %v364 = vld [vmem:[%s3 + $0x48] sm:$0xff]
  %v365 = vld [vmem:[%s3 + $0x50] sm:$0xff]
  %v366 = vld [vmem:[%s3 + $0x58] sm:$0xff]
  %v367 = vld [vmem:[%s3 + $0x60] sm:$0xff]
  %v368 = vld [vmem:[%s3 + $0x68] sm:$0xff]
  %v369 = vld [vmem:[%s3 + $0x70] sm:$0xff]
  %v370 = vld [vmem:[%s3 + $0x78] sm:$0xff]
  %v371 = vld [vmem:[%s4] sm:$0xff]
  %v372 = vld [vmem:[%s4 + $0x8] sm:$0xff]
  %v373 = vld [vmem:[%s4 + $0x10] sm:$0xff]
  %v374 = vld [vmem:[%s4 + $0x18] sm:$0xff]
  %v375 = vld [vmem:[%s4 + $0x20] sm:$0xff]
  %v376 = vld [vmem:[%s4 + $0x28] sm:$0xff]
  %v377 = vld [vmem:[%s4 + $0x30] sm:$0xff]
  %v378 = vld [vmem:[%s4 + $0x38] sm:$0xff]
  %v379 = vld [vmem:[%s4 + $0x40] sm:$0xff]
  %v380 = vld [vmem:[%s4 + $0x48] sm:$0xff]
  %v381 = vld [vmem:[%s4 + $0x50] sm:$0xff]
  %v382 = vld [vmem:[%s4 + $0x58] sm:$0xff]
  %v383 = vld [vmem:[%s4 + $0x60] sm:$0xff]
  %v384 = vld [vmem:[%s4 + $0x68] sm:$0xff]
  %v385 = vld [vmem:[%s4 + $0x70] sm:$0xff]
  %v386 = vld [vmem:[%s4 + $0x78] sm:$0xff]
  %388 = vset.pattern.permute.xlu0 0
  %389 = vperm.xlu0 %388, %v371
  %v390 = vpop.permute.xlu0 %389
  %393 = vset.pattern.permute.xlu0 0
  %394 = vperm.xlu0 %393, %v372
  %v395 = vpop.permute.xlu0 %394
  %398 = vset.pattern.permute.xlu0 0
  %399 = vperm.xlu0 %398, %v373
  %v400 = vpop.permute.xlu0 %399
  %403 = vset.pattern.permute.xlu0 0
  %404 = vperm.xlu0 %403, %v374
  %v405 = vpop.permute.xlu0 %404
  %408 = vset.pattern.permute.xlu0 0
  %409 = vperm.xlu0 %408, %v375
  %v410 = vpop.permute.xlu0 %409
  %413 = vset.pattern.permute.xlu0 0
  %414 = vperm.xlu0 %413, %v376
  %v415 = vpop.permute.xlu0 %414
  %418 = vset.pattern.permute.xlu0 0
  %419 = vperm.xlu0 %418, %v377
  %v420 = vpop.permute.xlu0 %419
  %423 = vset.pattern.permute.xlu0 0
  %424 = vperm.xlu0 %423, %v378
  %v425 = vpop.permute.xlu0 %424
  %428 = vset.pattern.permute.xlu0 0
  %429 = vperm.xlu0 %428, %v379
  %v430 = vpop.permute.xlu0 %429
  %433 = vset.pattern.permute.xlu0 0
  %434 = vperm.xlu0 %433, %v380
  %v435 = vpop.permute.xlu0 %434
  %438 = vset.pattern.permute.xlu0 0
  %439 = vperm.xlu0 %438, %v381
  %v440 = vpop.permute.xlu0 %439
  %443 = vset.pattern.permute.xlu0 0
  %444 = vperm.xlu0 %443, %v382
  %v445 = vpop.permute.xlu0 %444
  %448 = vset.pattern.permute.xlu0 0
  %449 = vperm.xlu0 %448, %v383
  %v450 = vpop.permute.xlu0 %449
  %453 = vset.pattern.permute.xlu0 0
  %454 = vperm.xlu0 %453, %v384
  %v455 = vpop.permute.xlu0 %454
  %458 = vset.pattern.permute.xlu0 0
  %459 = vperm.xlu0 %458, %v385
  %v460 = vpop.permute.xlu0 %459
  %463 = vset.pattern.permute.xlu0 0
  %464 = vperm.xlu0 %463, %v386
  %v465 = vpop.permute.xlu0 %464
  %467 = vmatprep.subr.mxu0 0.0
  %468 = vmatpush1.msra.mxu0 %v354
  %469 = vmatprep.subr.mxu0 0.0
  %470 = vmatpush1.msra.mxu0 %v353
  %471 = vmatprep.subr.mxu0 0.0
  %472 = vmatpush1.msra.mxu0 %v352
  %473 = vmatprep.subr.mxu0 0.0
  %474 = vmatpush1.msra.mxu0 %v351
  %475 = vmatprep.subr.mxu0 0.0
  %476 = vmatpush1.msra.mxu0 %v350
  %477 = vmatprep.subr.mxu0 0.0
  %478 = vmatpush1.msra.mxu0 %v349
  %479 = vmatprep.subr.mxu0 0.0
  %480 = vmatpush1.msra.mxu0 %v348
  %481 = vmatprep.subr.mxu0 0.0
  %482 = vmatpush1.msra.mxu0 %v347
  %483 = vmatprep.subr.mxu0 0.0
  %484 = vmatpush1.msra.mxu0 %v346
  %485 = vmatprep.subr.mxu0 0.0
  %486 = vmatpush1.msra.mxu0 %v345
  %487 = vmatprep.subr.mxu0 0.0
  %488 = vmatpush1.msra.mxu0 %v344
  %489 = vmatprep.subr.mxu0 0.0
  %490 = vmatpush1.msra.mxu0 %v343
  %491 = vmatprep.subr.mxu0 0.0
  %492 = vmatpush1.msra.mxu0 %v342
  %493 = vmatprep.subr.mxu0 0.0
  %494 = vmatpush1.msra.mxu0 %v341
  %495 = vmatprep.subr.mxu0 0.0
  %496 = vmatpush1.msra.mxu0 %v340
  %497 = vmatprep.subr.mxu0 0.0
  %498 = vmatpush1.msra.mxu0 %v339
  %499 = vmatprep.subr.mxu0 0.0
  %500 = vmatpush2.msra.mxu0 0.0
  %501 = vmatprep.subr.mxu0 0.0
  %502 = vmatpush2.msra.mxu0 0.0
  %503 = vmatprep.subr.mxu0 0.0
  %504 = vmatpush2.msra.mxu0 0.0
  %505 = vmatprep.subr.mxu0 0.0
  %506 = vmatpush2.msra.mxu0 0.0
  %507 = vmatprep.subr.mxu0 0.0
  %508 = vmatpush2.msra.mxu0 0.0
  %509 = vmatprep.subr.mxu0 0.0
  %510 = vmatpush2.msra.mxu0 0.0
  %511 = vmatprep.subr.mxu0 0.0
  %512 = vmatpush2.msra.mxu0 0.0
  %513 = vmatprep.subr.mxu0 0.0
  %514 = vmatpush2.msra.mxu0 0.0
  %515 = vmatprep.subr.mxu0 0.0
  %516 = vmatpush2.msra.mxu0 0.0
  %517 = vmatprep.subr.mxu0 0.0
  %518 = vmatpush2.msra.mxu0 0.0
  %519 = vmatprep.subr.mxu0 0.0
  %520 = vmatpush2.msra.mxu0 0.0
  %521 = vmatprep.subr.mxu0 0.0
  %522 = vmatpush2.msra.mxu0 0.0
  %523 = vmatprep.subr.mxu0 0.0
  %524 = vmatpush2.msra.mxu0 0.0
  %525 = vmatprep.subr.mxu0 0.0
  %526 = vmatpush2.msra.mxu0 0.0
  %527 = vmatprep.subr.mxu0 0.0
  %528 = vmatpush2.msra.mxu0 0.0
  %529 = vmatprep.subr.mxu0 0.0
  %530 = vmatpush2.msra.mxu0 0.0
  %531 = vmatprep.mubr.f32.mxu0 0.0
  %532 = vmatmul.mubr.f32.gmra.mxu0 %v355
  %v533 = vpop.f32.mrf.mxu0
  %v534 = vadd.f32 %v390, %v533
  %v535 = vpop.f32.mrf.mxu0
  %536 = vmatprep.mubr.f32.mxu0 0.0
  %537 = vmatmul.mubr.f32.gmra.mxu0 %v356
  %v538 = vpop.f32.mrf.mxu0
  %v539 = vadd.f32 %v395, %v538
  %v540 = vpop.f32.mrf.mxu0
  %541 = vmatprep.mubr.f32.mxu0 0.0
  %542 = vmatmul.mubr.f32.gmra.mxu0 %v357
  %v543 = vpop.f32.mrf.mxu0
  %v544 = vadd.f32 %v400, %v543
  %v545 = vpop.f32.mrf.mxu0
  %546 = vmatprep.mubr.f32.mxu0 0.0
  %547 = vmatmul.mubr.f32.gmra.mxu0 %v358
  %v548 = vpop.f32.mrf.mxu0
  %v549 = vadd.f32 %v405, %v548
  %v550 = vpop.f32.mrf.mxu0
  %551 = vmatprep.mubr.f32.mxu0 0.0
  %552 = vmatmul.mubr.f32.gmra.mxu0 %v359
  %v553 = vpop.f32.mrf.mxu0
  %v554 = vadd.f32 %v410, %v553
  %v555 = vpop.f32.mrf.mxu0
  %556 = vmatprep.mubr.f32.mxu0 0.0
  %557 = vmatmul.mubr.f32.gmra.mxu0 %v360
  %v558 = vpop.f32.mrf.mxu0
  %v559 = vadd.f32 %v415, %v558
  %v560 = vpop.f32.mrf.mxu0
  %561 = vmatprep.mubr.f32.mxu0 0.0
  %562 = vmatmul.mubr.f32.gmra.mxu0 %v361
  %v563 = vpop.f32.mrf.mxu0
  %v564 = vadd.f32 %v420, %v563
  %v565 = vpop.f32.mrf.mxu0
  %566 = vmatprep.mubr.f32.mxu0 0.0
  %567 = vmatmul.mubr.f32.gmra.mxu0 %v362
  %v568 = vpop.f32.mrf.mxu0
  %v569 = vadd.f32 %v425, %v568
  %v570 = vpop.f32.mrf.mxu0
  %571 = vmatprep.mubr.f32.mxu0 0.0
  %572 = vmatmul.mubr.f32.gmra.mxu0 %v363
  %v573 = vpop.f32.mrf.mxu0
  %v574 = vadd.f32 %v430, %v573
  %v575 = vpop.f32.mrf.mxu0
  %576 = vmatprep.mubr.f32.mxu0 0.0
  %577 = vmatmul.mubr.f32.gmra.mxu0 %v364
  %v578 = vpop.f32.mrf.mxu0
  %v579 = vadd.f32 %v435, %v578
  %v580 = vpop.f32.mrf.mxu0
  %581 = vmatprep.mubr.f32.mxu0 0.0
  %582 = vmatmul.mubr.f32.gmra.mxu0 %v365
  %v583 = vpop.f32.mrf.mxu0
  %v584 = vadd.f32 %v440, %v583
  %v585 = vpop.f32.mrf.mxu0
  %586 = vmatprep.mubr.f32.mxu0 0.0
  %587 = vmatmul.mubr.f32.gmra.mxu0 %v366
  %v588 = vpop.f32.mrf.mxu0
  %v589 = vadd.f32 %v445, %v588
  %v590 = vpop.f32.mrf.mxu0
  %591 = vmatprep.mubr.f32.mxu0 0.0
  %592 = vmatmul.mubr.f32.gmra.mxu0 %v367
  %v593 = vpop.f32.mrf.mxu0
  %v594 = vadd.f32 %v450, %v593
  %v595 = vpop.f32.mrf.mxu0
  %596 = vmatprep.mubr.f32.mxu0 0.0
  %597 = vmatmul.mubr.f32.gmra.mxu0 %v368
  %v598 = vpop.f32.mrf.mxu0
  %v599 = vadd.f32 %v455, %v598
  %v600 = vpop.f32.mrf.mxu0
  %601 = vmatprep.mubr.f32.mxu0 0.0
  %602 = vmatmul.mubr.f32.gmra.mxu0 %v369
  %v603 = vpop.f32.mrf.mxu0
  %v604 = vadd.f32 %v460, %v603
  %v605 = vpop.f32.mrf.mxu0
  %606 = vmatprep.mubr.f32.mxu0 0.0
  %607 = vmatmul.mubr.f32.gmra.mxu0 %v370
  %v608 = vpop.f32.mrf.mxu0
  %v609 = vadd.f32 %v465, %v608
  %v610 = vpop.f32.mrf.mxu0
  %611 = vdwg.mxu0
  %v612 = vmax.f32 %v534, 0.0
  %v613 = vmax.f32 %v539, 0.0
  %v614 = vmax.f32 %v544, 0.0
  %v615 = vmax.f32 %v549, 0.0
  %v616 = vmax.f32 %v554, 0.0
  %v617 = vmax.f32 %v559, 0.0
  %v618 = vmax.f32 %v564, 0.0
  %v619 = vmax.f32 %v569, 0.0
  %v620 = vmax.f32 %v574, 0.0
  %v621 = vmax.f32 %v579, 0.0
  %v622 = vmax.f32 %v584, 0.0
  %v623 = vmax.f32 %v589, 0.0
  %v624 = vmax.f32 %v594, 0.0
  %v625 = vmax.f32 %v599, 0.0
  %v626 = vmax.f32 %v604, 0.0
  %v627 = vmax.f32 %v609, 0.0
  %v628 = vld [vmem:[%s5] sm:$0x1]
  %v629 = vld [vmem:[%s6] sm:$0xff]
  %v630 = vld [vmem:[%s6 + $0x8] sm:$0xff]
  %632 = vset.pattern.permute.xlu0 0
  %633 = vperm.xlu0 %632, %v629
  %v634 = vpop.permute.xlu0 %633
  %637 = vset.pattern.permute.xlu0 0
  %638 = vperm.xlu0 %637, %v630
  %v639 = vpop.permute.xlu0 %638
  %v641 = vmul.f32 %v31, %v634
  %v642 = vmul.f32 %v32, %v639
  %v643 = vadd.f32 %v641, %v642
  %v644 = vrot.slane %v643, 4
  %v645 = vadd.f32 %v643, %v644
  %v646 = vrot.slane %v645, 2
  %v647 = vadd.f32 %v645, %v646
  %v648 = vrot.slane %v647, 1
  %v649 = vadd.f32 %v647, %v648
  %650 = vmatprep.subr.mxu0 0.0
  %651 = vmatpush1.msra.mxu0 %v627
  %652 = vmatprep.subr.mxu0 0.0
  %653 = vmatpush1.msra.mxu0 %v626
  %654 = vmatprep.subr.mxu0 0.0
  %655 = vmatpush1.msra.mxu0 %v625
  %656 = vmatprep.subr.mxu0 0.0
  %657 = vmatpush1.msra.mxu0 %v624
  %658 = vmatprep.subr.mxu0 0.0
  %659 = vmatpush1.msra.mxu0 %v623
  %660 = vmatprep.subr.mxu0 0.0
  %661 = vmatpush1.msra.mxu0 %v622
  %662 = vmatprep.subr.mxu0 0.0
  %663 = vmatpush1.msra.mxu0 %v621
  %664 = vmatprep.subr.mxu0 0.0
  %665 = vmatpush1.msra.mxu0 %v620
  %666 = vmatprep.subr.mxu0 0.0
  %667 = vmatpush1.msra.mxu0 %v619
  %668 = vmatprep.subr.mxu0 0.0
  %669 = vmatpush1.msra.mxu0 %v618
  %670 = vmatprep.subr.mxu0 0.0
  %671 = vmatpush1.msra.mxu0 %v617
  %672 = vmatprep.subr.mxu0 0.0
  %673 = vmatpush1.msra.mxu0 %v616
  %674 = vmatprep.subr.mxu0 0.0
  %675 = vmatpush1.msra.mxu0 %v615
  %676 = vmatprep.subr.mxu0 0.0
  %677 = vmatpush1.msra.mxu0 %v614
  %678 = vmatprep.subr.mxu0 0.0
  %679 = vmatpush1.msra.mxu0 %v613
  %680 = vmatprep.subr.mxu0 0.0
  %681 = vmatpush1.msra.mxu0 %v612
  %682 = vmatprep.subr.mxu0 0.0
  %683 = vmatpush2.msra.mxu0 0.0
  %684 = vmatprep.subr.mxu0 0.0
  %685 = vmatpush2.msra.mxu0 0.0
  %686 = vmatprep.subr.mxu0 0.0
  %687 = vmatpush2.msra.mxu0 0.0
  %688 = vmatprep.subr.mxu0 0.0
  %689 = vmatpush2.msra.mxu0 0.0
  %690 = vmatprep.subr.mxu0 0.0
  %691 = vmatpush2.msra.mxu0 0.0
  %692 = vmatprep.subr.mxu0 0.0
  %693 = vmatpush2.msra.mxu0 0.0
  %694 = vmatprep.subr.mxu0 0.0
  %695 = vmatpush2.msra.mxu0 0.0
  %696 = vmatprep.subr.mxu0 0.0
  %697 = vmatpush2.msra.mxu0 0.0
  %698 = vmatprep.subr.mxu0 0.0
  %699 = vmatpush2.msra.mxu0 0.0
  %700 = vmatprep.subr.mxu0 0.0
  %701 = vmatpush2.msra.mxu0 0.0
  %702 = vmatprep.subr.mxu0 0.0
  %703 = vmatpush2.msra.mxu0 0.0
  %704 = vmatprep.subr.mxu0 0.0
  %705 = vmatpush2.msra.mxu0 0.0
  %706 = vmatprep.subr.mxu0 0.0
  %707 = vmatpush2.msra.mxu0 0.0
  %708 = vmatprep.subr.mxu0 0.0
  %709 = vmatpush2.msra.mxu0 0.0
  %710 = vmatprep.subr.mxu0 0.0
  %711 = vmatpush2.msra.mxu0 0.0
  %712 = vmatprep.subr.mxu0 0.0
  %713 = vmatpush2.msra.mxu0 0.0
  %714 = vmatprep.mubr.f32.mxu0 0.0
  %715 = vmatmul.mubr.f32.gmra.mxu0 %v628
  %v716 = vpop.f32.mrf.mxu0
  %v717 = vadd.f32 %v649, %v716
  %v718 = vpop.f32.mrf.mxu0
  %719 = vdwg.mxu0
  %v720 = vld [vmem:[#allocation2] sm:$0x1]
  %722 = vset.pattern.permute.xlu0 0
  %723 = vperm.xlu0 %722, %v720
  %v724 = vpop.permute.xlu0 %723
  %v726 = vlaneseq
  %v727 = vshrl.u32 %v726, 7
  %v728 = vsub.s32 0, %v727
  %v729 = vrot.slane %v724, %v728
  %v730 = vadd.f32 %v717, %v729
  %731 = vst [vmem:[%s8] sm:$0x1] %v730
  // Predicated region
  $region34: #{wide_deep_forward.1} parent=0 // pred_check
    _
  $region35: #{wide_deep_forward.1} parent=0 // pred_check_branch
    %733 = sbr.rel (0) target = $region37
  $region36: #{wide_deep_forward.1} parent=0 // pred_region
    _
  $region37: #{wide_deep_forward.1} parent=0 // pred_fallthru
    _
  // Predicated region
  $region38: #{wide_deep_forward.1} parent=0 // pred_check
    _
  $region39: #{wide_deep_forward.1} parent=0 // pred_check_branch
    %735 = sbr.rel (0) target = $region41
  $region40: #{wide_deep_forward.1} parent=0 // pred_region
    _
  $region41: #{wide_deep_forward.1} parent=0 // pred_fallthru
    _

</llo_original>
